<compile_context>
chip_gen: v7x
topology: tpu7x:2x2x1
jax: 0.10.0
libtpu: 0.0.40
codegen_flags: <defaults>
</compile_context>

<pallas_src>
import functools

import jax
import jax.numpy as jnp
from jax.experimental import pallas as pl
from jax.experimental.pallas import tpu as pltpu


LANE = 128      # TPU lane width (last dim)
SUBLANE = 8     # TPU sublane width (second-to-last dim, f32)


def _round_up(x, m):
    return (x + m - 1) // m * m


# ----------------------------- kernels -------------------------------------


def highway_kernel(x1_ref, x2_ref, wh_ref, b_ref, o_ref, *, matmul_dtype):
    """One (TILE_N, H_pad) tile of the Highway block."""
    x1 = x1_ref[...]
    x2 = x2_ref[...].astype(jnp.float32)
    # gate logits: x1 @ W_hw.T + b  (wh_ref already holds W.T, bf16; f32 acc)
    z = jnp.dot(x1.astype(matmul_dtype), wh_ref[...],
                preferred_element_type=jnp.float32)
    gate = jax.nn.sigmoid(z + b_ref[...])      # sigmoid -> EUP slot
    x1f = x1.astype(jnp.float32)
    # gate*x2 + (1-gate)*x1 == x1 + gate*(x2 - x1)
    o_ref[...] = (x1f + gate * (x2 - x1f)).astype(o_ref.dtype)


def gcn_highway_kernel(x1_ref, m_ref, wg_ref, wh_ref, b_ref, o_ref, *,
                       matmul_dtype):
    """Fused GCN-linear + Highway for one (TILE_N, H_pad) tile.

    x2 = m @ W_gcn.T ; gate = sigmoid(x1 @ W_hw.T + b) ; out = x1 + gate*(x2-x1)
    """
    x1 = x1_ref[...]
    m = m_ref[...]
    x2 = jnp.dot(m.astype(matmul_dtype), wg_ref[...],
                 preferred_element_type=jnp.float32)
    z = jnp.dot(x1.astype(matmul_dtype), wh_ref[...],
                preferred_element_type=jnp.float32)
    gate = jax.nn.sigmoid(z + b_ref[...])
    x1f = x1.astype(jnp.float32)
    o_ref[...] = (x1f + gate * (x2 - x1f)).astype(o_ref.dtype)


# ------------------------ one-time parameter prep --------------------------


def prepare_linear_weight(weight, *, matmul_dtype=jnp.bfloat16):
    """Pre-transpose / pad / cast an nn.Linear weight ONCE (off the hot path).

    weight: [out_features, in_features] (PyTorch convention).
    Returns W.T padded to [in_pad, out_pad] in `matmul_dtype`.
    """
    out_f, in_f = weight.shape
    in_pad = _round_up(in_f, LANE)
    out_pad = _round_up(out_f, LANE)
    wt = jnp.pad(weight.T, ((0, in_pad - in_f), (0, out_pad - out_f)))
    return wt.astype(matmul_dtype)


def prepare_bias(bias):
    """Pad bias [H] -> f32 [1, H_pad] (lane-dense broadcast row)."""
    h = bias.shape[0]
    h_pad = _round_up(h, LANE)
    return jnp.pad(bias.astype(jnp.float32), (0, h_pad - h)).reshape(1, h_pad)


# ------------------------------ wrappers ------------------------------------


def _pick_tile_n(n, h_pad, x_bytes, n_weights, w_bytes, n_row_arrays,
                 vmem_budget=24 * 1024 * 1024):
    """Largest batch tile (multiple of 8) fitting a conservative VMEM budget."""
    # Grid-invariant residents (weights + bias), assume double-buffering.
    resident = 2 * (n_weights * h_pad * h_pad * w_bytes + h_pad * 4)
    # Per-row tiles (inputs + output), double-buffered.
    per_row = 2 * h_pad * n_row_arrays * x_bytes
    max_rows = max((vmem_budget - resident) // per_row, SUBLANE)
    tile = min(1024, int(max_rows), _round_up(n, SUBLANE))
    tile = max(SUBLANE, (tile // SUBLANE) * SUBLANE)
    return int(tile)


def _call_tiled(kernel_fn, xs, ws, bias_pad, out_dtype):
    """Run `kernel_fn` over node tiles. xs: [N,H] arrays; ws: padded W.T's."""
    n, h = xs[0].shape
    h_pad = ws[0].shape[0]
    x_bytes = jnp.dtype(xs[0].dtype).itemsize
    w_bytes = jnp.dtype(ws[0].dtype).itemsize

    tile_n = _pick_tile_n(n, h_pad, x_bytes, len(ws), w_bytes,
                          n_row_arrays=len(xs) + 1)
    n_pad = _round_up(n, tile_n)

    needs_pad = (n_pad, h_pad) != (n, h)
    if needs_pad:
        pad = ((0, n_pad - n), (0, h_pad - h))
        xs = [jnp.pad(x, pad) for x in xs]

    grid = (n_pad // tile_n,)

    # Only raise the scoped VMEM limit when the estimate needs it.
    # TODO(synk): for very large H (weights alone exceed the budget) add a
    # K-reduction grid axis with an f32 VMEM accumulator instead.
    vmem_estimate = (2 * (len(ws) * h_pad * h_pad * w_bytes + h_pad * 4)
                     + 2 * tile_n * h_pad * (len(xs) + 1) * x_bytes)
    compiler_kwargs = dict(dimension_semantics=("parallel",))
    if vmem_estimate > 28 * 1024 * 1024:
        compiler_kwargs["vmem_limit_bytes"] = int(
            min(vmem_estimate + (8 << 20), 100 << 20))

    x_spec = pl.BlockSpec((tile_n, h_pad), lambda i: (i, 0))
    # Grid-invariant weights / bias: constant index_map -> fetched once,
    # stay VMEM-resident across all node tiles.
    w_spec = pl.BlockSpec((h_pad, h_pad), lambda i: (0, 0))
    b_spec = pl.BlockSpec((1, h_pad), lambda i: (0, 0))

    out = pl.pallas_call(
        kernel_fn,
        out_shape=jax.ShapeDtypeStruct((n_pad, h_pad), out_dtype),
        grid_spec=pltpu.PrefetchScalarGridSpec(
            num_scalar_prefetch=0,
            grid=grid,
            in_specs=[x_spec] * len(xs) + [w_spec] * len(ws) + [b_spec],
            out_specs=pl.BlockSpec((tile_n, h_pad), lambda i: (i, 0)),
        ),
        compiler_params=pltpu.CompilerParams(**compiler_kwargs),
    )(*xs, *ws, bias_pad)

    if needs_pad:
        out = out[:n, :h]
    return out


def highway(x1, x2, wh_t_pad, bias_pad):
    """Highway: out = x1 + sigmoid(x1 @ W_hw.T + b) * (x2 - x1)."""
    kern = functools.partial(highway_kernel, matmul_dtype=wh_t_pad.dtype)
    return _call_tiled(kern, [x1, x2], [wh_t_pad], bias_pad, x1.dtype)


def gcn_linear_highway(x1, m_agg, wg_t_pad, wh_t_pad, bias_pad):
    """Fused GCN-linear + Highway.

    x1:    [N, H] node features (highway input).
    m_agg: [N, H] = relu(spmm(norm, x1)) sparse aggregate (computed elsewhere).
    """
    kern = functools.partial(gcn_highway_kernel, matmul_dtype=wh_t_pad.dtype)
    return _call_tiled(kern, [x1, m_agg], [wg_t_pad, wh_t_pad], bias_pad,
                       x1.dtype)


# ----------------------------- references -----------------------------------


def highway_ref(x1, x2, w_hw, b_hw):
    gate = jax.nn.sigmoid(x1 @ w_hw.T + b_hw)
    return gate * x2 + (1.0 - gate) * x1


def gcn_linear_highway_ref(x1, m_agg, w_gcn, w_hw, b_hw):
    x2 = m_agg @ w_gcn.T
    return highway_ref(x1, x2, w_hw, b_hw)


# --------------------------------- demo --------------------------------------


if __name__ == "__main__":
    key = jax.random.PRNGKey(0)
    k1, k2, k3, k4, k5 = jax.random.split(key, 5)

    # Small shapes consistent with RAGA's per-node Highway(e_hidden) path.
    N, H = 8, 32
    x_e = jax.random.normal(k1, (N, H), dtype=jnp.float32)
    # Simulated output of the sparse normalized aggregation relu(spmm(...)).
    m_agg = jax.nn.relu(jax.random.normal(k2, (N, H), dtype=jnp.float32))

    # Deterministic params (mimic nn.Linear's uniform(-1/sqrt(H), 1/sqrt(H))).
    bound = 1.0 / jnp.sqrt(jnp.float32(H))
    w_gcn = jax.random.uniform(k3, (H, H), jnp.float32, -bound, bound)
    w_hw = jax.random.uniform(k4, (H, H), jnp.float32, -bound, bound)
    b_hw = jax.random.uniform(k5, (H,), jnp.float32, -bound, bound)

    # One-time parameter prep (transpose + pad + bf16 cast) off the hot path.
    wg_t = prepare_linear_weight(w_gcn)
    wh_t = prepare_linear_weight(w_hw)
    b_p = prepare_bias(b_hw)

    out_fused = jax.block_until_ready(
        gcn_linear_highway(x_e, m_agg, wg_t, wh_t, b_p))
    out_hwy = jax.block_until_ready(highway(x_e, m_agg, wh_t, b_p))

    ref_fused = gcn_linear_highway_ref(x_e, m_agg, w_gcn, w_hw, b_hw)
    ref_hwy = highway_ref(x_e, m_agg, w_hw, b_hw)

    # bf16 matmul inputs (f32 accumulation) => allow ~1e-2-level error.
    assert jnp.allclose(out_fused, ref_fused, atol=5e-2, rtol=5e-2), \
        "fused GCN-linear + Highway mismatch vs reference"
    assert jnp.allclose(out_hwy, ref_hwy, atol=5e-2, rtol=5e-2), \
        "Highway mismatch vs reference"

    print("KERNEL_OK")
</pallas_src>

<mosaic_0001>
module attributes {stable_mosaic.version = 11 : i64} {
  func.func @gcn_highway_kernel(%arg0: i32, %arg1: memref<8x128xf32, #tpu.memory_space<vmem>>, %arg2: memref<8x128xf32, #tpu.memory_space<vmem>>, %arg3: memref<128x128xbf16, #tpu.memory_space<vmem>>, %arg4: memref<128x128xbf16, #tpu.memory_space<vmem>>, %arg5: memref<1x128xf32, #tpu.memory_space<vmem>>, %arg6: memref<8x128xf32, #tpu.memory_space<vmem>>) attributes {dimension_semantics = [#tpu.dimension_semantics<parallel>], iteration_bounds = array<i64: 1>, scalar_prefetch = 0 : i64, scratch_operands = 0 : i64, tpu.core_type = #tpu.core_type<tc>, window_params = [{transform_indices = @transform_0, window_bounds = array<i64: 8, 128>}, {transform_indices = @transform_1, window_bounds = array<i64: 8, 128>}, {pipeline_mode = #tpu.pipeline_mode<synchronous>, transform_indices = @transform_2, window_bounds = array<i64: 128, 128>}, {pipeline_mode = #tpu.pipeline_mode<synchronous>, transform_indices = @transform_3, window_bounds = array<i64: 128, 128>}, {pipeline_mode = #tpu.pipeline_mode<synchronous>, transform_indices = @transform_4, window_bounds = array<i64: 1, 128>}, {transform_indices = @transform_5, window_bounds = array<i64: 8, 128>}]} {
    %c0 = arith.constant 0 : index
    %c0_0 = arith.constant 0 : index
    %0 = vector.load %arg1[%c0, %c0_0] : memref<8x128xf32, #tpu.memory_space<vmem>>, vector<8x128xf32>
    %c0_1 = arith.constant 0 : index
    %c0_2 = arith.constant 0 : index
    %1 = vector.load %arg2[%c0_1, %c0_2] : memref<8x128xf32, #tpu.memory_space<vmem>>, vector<8x128xf32>
    %2 = arith.truncf %1 : vector<8x128xf32> to vector<8x128xbf16>
    %c0_3 = arith.constant 0 : index
    %c0_4 = arith.constant 0 : index
    %3 = vector.load %arg3[%c0_3, %c0_4] : memref<128x128xbf16, #tpu.memory_space<vmem>>, vector<128x128xbf16>
    %cst = arith.constant dense<0.000000e+00> : vector<8x128xf32>
    %4 = tpu.matmul %2, %3, %cst {dimension_numbers = #tpu.dot_dimension_numbers<[1], [0], [0], [1], [0, 0, 1, 1], [], []>} : vector<8x128xbf16>, vector<128x128xbf16>, vector<8x128xf32> -> vector<8x128xf32>
    %5 = arith.truncf %0 : vector<8x128xf32> to vector<8x128xbf16>
    %c0_5 = arith.constant 0 : index
    %c0_6 = arith.constant 0 : index
    %6 = vector.load %arg4[%c0_5, %c0_6] : memref<128x128xbf16, #tpu.memory_space<vmem>>, vector<128x128xbf16>
    %cst_7 = arith.constant dense<0.000000e+00> : vector<8x128xf32>
    %7 = tpu.matmul %5, %6, %cst_7 {dimension_numbers = #tpu.dot_dimension_numbers<[1], [0], [0], [1], [0, 0, 1, 1], [], []>} : vector<8x128xbf16>, vector<128x128xbf16>, vector<8x128xf32> -> vector<8x128xf32>
    %c0_8 = arith.constant 0 : index
    %c0_9 = arith.constant 0 : index
    %8 = vector.load %arg5[%c0_8, %c0_9] : memref<1x128xf32, #tpu.memory_space<vmem>>, vector<1x128xf32>
    %9 = vector.broadcast %8 : vector<1x128xf32> to vector<8x128xf32>
    %10 = arith.addf %7, %9 : vector<8x128xf32>
    %11 = arith.negf %10 : vector<8x128xf32>
    %12 = math.exp %11 : vector<8x128xf32>
    %cst_10 = arith.constant 1.000000e+00 : f32
    %13 = vector.broadcast %cst_10 : f32 to vector<8x128xf32>
    %14 = arith.addf %13, %12 : vector<8x128xf32>
    %15 = arith.divf %13, %14 : vector<8x128xf32>
    %16 = arith.subf %4, %0 : vector<8x128xf32>
    %17 = arith.mulf %15, %16 : vector<8x128xf32>
    %18 = arith.addf %0, %17 : vector<8x128xf32>
    %c0_11 = arith.constant 0 : index
    %c0_12 = arith.constant 0 : index
    %19 = vector.load %arg6[%c0_11, %c0_12] : memref<8x128xf32, #tpu.memory_space<vmem>>, vector<8x128xf32>
    tpu.vector_store %arg6[%c0_11, %c0_12], %18 {strides = array<i32>} : memref<8x128xf32, #tpu.memory_space<vmem>>, vector<8x128xf32>,
    return
  }
  func.func @transform_0(%arg0: i32) -> (i32, i32) {
    %c0_i32 = arith.constant 0 : i32
    %c0_i32_0 = arith.constant 0 : i32
    return %arg0, %c0_i32 : i32, i32
  }
  func.func @transform_1(%arg0: i32) -> (i32, i32) {
    %c0_i32 = arith.constant 0 : i32
    %c0_i32_0 = arith.constant 0 : i32
    return %arg0, %c0_i32 : i32, i32
  }
  func.func @transform_2(%arg0: i32) -> (i32, i32) {
    %c0_i32 = arith.constant 0 : i32
    %c0_i32_0 = arith.constant 0 : i32
    %c0_i32_1 = arith.constant 0 : i32
    return %c0_i32, %c0_i32_0 : i32, i32
  }
  func.func @transform_3(%arg0: i32) -> (i32, i32) {
    %c0_i32 = arith.constant 0 : i32
    %c0_i32_0 = arith.constant 0 : i32
    %c0_i32_1 = arith.constant 0 : i32
    return %c0_i32, %c0_i32_0 : i32, i32
  }
  func.func @transform_4(%arg0: i32) -> (i32, i32) {
    %c0_i32 = arith.constant 0 : i32
    %c0_i32_0 = arith.constant 0 : i32
    %c0_i32_1 = arith.constant 0 : i32
    return %c0_i32, %c0_i32_0 : i32, i32
  }
  func.func @transform_5(%arg0: i32) -> (i32, i32) {
    %c0_i32 = arith.constant 0 : i32
    %c0_i32_0 = arith.constant 0 : i32
    return %arg0, %c0_i32 : i32, i32
  }
}

</mosaic_0001>

<llo_original>
// kernel: tpu_custom_call.1
$region0: #{tpu_custom_call.1}
  #allocation0 [shape = 'u32[]', space=smem, size = 0x4, offset = 0x4, fixed_abs, tag = 'smem constant byte address 0x4 - core index']
  #allocation1 [shape = 'u32[144,128]{1,0:T(1,128)}', space=vmem, size = 0x12000, scoped, tag = 'internal scratch']
  %s0 = inlined_call_operand.hbm [shape: f32[8,128], index: 0, kind: input, shape index: {}]
  %s1 = inlined_call_operand.hbm [shape: f32[8,128], index: 1, kind: input, shape index: {}]
  %s2 = inlined_call_operand.hbm [shape: bf16[128,128], index: 2, kind: input, shape index: {}]
  %s3 = inlined_call_operand.hbm [shape: bf16[128,128], index: 3, kind: input, shape index: {}]
  %s4 = inlined_call_operand.vmem [shape: f32[1,128], index: 4, kind: input, shape index: {}]
  %s5 = inlined_call_operand.hbm [shape: f32[8,128], index: 5, kind: output, shape index: {}]
  %s6 = sld [smem:[#allocation0]]
  $region46: #{tpu_custom_call.1} parent=0
    _
  %s8 = ssub.s32 1, %s6
  %s9 = scalar_select 0, %s8, %s6
  $region1: #{tpu_custom_call.1} parent=0
    #allocation2 [shape = 'u8[4096]{0}', space=vmem, size = 0x1000, scoped, tag = 'input window, operand 0, single buffered']
    #allocation3 [shape = 's32[1]{0}', space=sflag, size = 0x4, scoped, tag = 'scoped memory for tpu_custom_call.1']
    #allocation4 [shape = 's32[1]{0}', space=sflag, size = 0x4, scoped, tag = 'scoped memory for tpu_custom_call.1']
    #allocation5 [shape = 'u8[4096]{0}', space=vmem, size = 0x1000, scoped, tag = 'input window, operand 1, single buffered']
    #allocation6 [shape = 's32[1]{0}', space=sflag, size = 0x4, scoped, tag = 'scoped memory for tpu_custom_call.1']
    #allocation7 [shape = 'u8[32768]{0}', space=vmem, size = 0x8000, scoped, tag = 'input window, operand 2, single buffered']
    #allocation8 [shape = 'u8[32768]{0}', space=vmem, size = 0x8000, scoped, tag = 'input window, operand 3, single buffered']
    #allocation9 [shape = 's32[1]{0}', space=sflag, size = 0x4, scoped, tag = 'scoped memory for tpu_custom_call.1']
    #allocation10 [shape = 'u8[4096]{0}', space=vmem, size = 0x1000, scoped, tag = 'output window, operand 0, single buffered']
    %10 = vsyncpa [#allocation3], 0
    %11 = vsyncpa [#allocation6], 0
    %12 = vsyncpa [#allocation9], 0
    %13 = vsyncpa [#allocation4], 0
    // Predicated region
    $region2: #{tpu_custom_call.1} parent=1 // pred_check
      _
    $region3: #{tpu_custom_call.1} parent=1 // pred_check_branch
      %15 = sbr.rel (0) target = $region5
    $region4: #{tpu_custom_call.1} parent=1 // pred_region
      %s17 = ssub.s32 128, 128
      %18 = vsyncadd [#allocation3], %s17
      %s20 = sshll.u32 [#allocation2], 4
      %s21 = int_to_ptr.vmem [resolvable:$true] %s20
      %23 = dma.hbm_to_vmem [thread:$0]  %s0, 128, %s21, [#allocation3]
    $region5: #{tpu_custom_call.1} parent=1 // pred_fallthru
      _
    // Predicated region
    $region6: #{tpu_custom_call.1} parent=1 // pred_check
      _
    $region7: #{tpu_custom_call.1} parent=1 // pred_check_branch
      %25 = sbr.rel (0) target = $region9
    $region8: #{tpu_custom_call.1} parent=1 // pred_region
      %s27 = ssub.s32 128, 128
      %28 = vsyncadd [#allocation6], %s27
      %s30 = sshll.u32 [#allocation5], 4
      %s31 = int_to_ptr.vmem [resolvable:$true] %s30
      %33 = dma.hbm_to_vmem [thread:$0]  %s1, 128, %s31, [#allocation6]
    $region9: #{tpu_custom_call.1} parent=1 // pred_fallthru
      _
    // Predicated region
    $region10: #{tpu_custom_call.1} parent=1 // pred_check
      _
    $region11: #{tpu_custom_call.1} parent=1 // pred_check_branch
      %35 = sbr.rel (0) target = $region13
    $region12: #{tpu_custom_call.1} parent=1 // pred_region
      %s37 = ssub.s32 1024, 1024
      %38 = vsyncadd [#allocation6], %s37
      %s39 = sshll.u32 [#allocation7], 4
      %s40 = int_to_ptr.vmem [resolvable:$true] %s39
      %45 = dma.hbm_to_vmem [thread:$0]  %s2, 1024, %s40, [#allocation6], 64, 64, 4
    $region13: #{tpu_custom_call.1} parent=1 // pred_fallthru
      _
    // Predicated region
    $region14: #{tpu_custom_call.1} parent=1 // pred_check
      _
    $region15: #{tpu_custom_call.1} parent=1 // pred_check_branch
      %47 = sbr.rel (0) target = $region17
    $region16: #{tpu_custom_call.1} parent=1 // pred_region
      %s49 = ssub.s32 1024, 1024
      %50 = vsyncadd [#allocation9], %s49
      %s51 = sshll.u32 [#allocation8], 4
      %s52 = int_to_ptr.vmem [resolvable:$true] %s51
      %57 = dma.hbm_to_vmem [thread:$0]  %s3, 1024, %s52, [#allocation9], 64, 64, 4
    $region17: #{tpu_custom_call.1} parent=1 // pred_fallthru
      _
    // Predicated region
    $region18: #{tpu_custom_call.1} parent=1 // pred_check
      _
    $region19: #{tpu_custom_call.1} parent=1 // pred_check_branch
      %59 = sbr.rel (0) target = $region21
    $region20: #{tpu_custom_call.1} parent=1 // pred_region
      _
    $region21: #{tpu_custom_call.1} parent=1 // pred_fallthru
      _
    // Predicated region
    $region22: #{tpu_custom_call.1} parent=1 // pred_check
      _
    $region23: #{tpu_custom_call.1} parent=1 // pred_check_branch
      %61 = sbr.rel (0) target = $region25
    $region24: #{tpu_custom_call.1} parent=1 // pred_region
      %62 = dma.done [#allocation3], 128
    $region25: #{tpu_custom_call.1} parent=1 // pred_fallthru
      _
    // Predicated region
    $region26: #{tpu_custom_call.1} parent=1 // pred_check
      _
    $region27: #{tpu_custom_call.1} parent=1 // pred_check_branch
      %64 = sbr.rel (0) target = $region29
    $region28: #{tpu_custom_call.1} parent=1 // pred_region
      %65 = dma.done [#allocation6], 128
    $region29: #{tpu_custom_call.1} parent=1 // pred_fallthru
      _
    // Predicated region
    $region30: #{tpu_custom_call.1} parent=1 // pred_check
      _
    $region31: #{tpu_custom_call.1} parent=1 // pred_check_branch
      %67 = sbr.rel (0) target = $region33
    $region32: #{tpu_custom_call.1} parent=1 // pred_region
      %68 = dma.done [#allocation6], 1024
    $region33: #{tpu_custom_call.1} parent=1 // pred_fallthru
      _
    // Predicated region
    $region34: #{tpu_custom_call.1} parent=1 // pred_check
      _
    $region35: #{tpu_custom_call.1} parent=1 // pred_check_branch
      %70 = sbr.rel (0) target = $region37
    $region36: #{tpu_custom_call.1} parent=1 // pred_region
      %71 = dma.done [#allocation9], 1024
    $region37: #{tpu_custom_call.1} parent=1 // pred_fallthru
      _
    %v73 = vld [vmem:[#allocation2] sm:$0xff]
    %v74 = vld [vmem:[#allocation5] sm:$0xff]
    %v75 = vpack.c.bf16 %v74, %v74
    %v76 = vld [vmem:[#allocation7] sm:$0xf]
    %v77 = vld [vmem:[#allocation7 + $0x4] sm:$0xf]
    %v78 = vld [vmem:[#allocation7 + $0x8] sm:$0xf]
    %v79 = vld [vmem:[#allocation7 + $0xc] sm:$0xf]
    %v80 = vld [vmem:[#allocation7 + $0x10] sm:$0xf]
    %v81 = vld [vmem:[#allocation7 + $0x14] sm:$0xf]
    %v82 = vld [vmem:[#allocation7 + $0x18] sm:$0xf]
    %v83 = vld [vmem:[#allocation7 + $0x1c] sm:$0xf]
    %v84 = vld [vmem:[#allocation7 + $0x20] sm:$0xf]
    %v85 = vld [vmem:[#allocation7 + $0x24] sm:$0xf]
    %v86 = vld [vmem:[#allocation7 + $0x28] sm:$0xf]
    %v87 = vld [vmem:[#allocation7 + $0x2c] sm:$0xf]
    %v88 = vld [vmem:[#allocation7 + $0x30] sm:$0xf]
    %v89 = vld [vmem:[#allocation7 + $0x34] sm:$0xf]
    %v90 = vld [vmem:[#allocation7 + $0x38] sm:$0xf]
    %v91 = vld [vmem:[#allocation7 + $0x3c] sm:$0xf]
    %v108 = vunpack.c.l.b16 %v76
    %v109 = vunpack.c.l.b16 %v77
    %v110 = vunpack.c.l.b16 %v78
    %v111 = vunpack.c.l.b16 %v79
    %v112 = vunpack.c.l.b16 %v80
    %v113 = vunpack.c.l.b16 %v81
    %v114 = vunpack.c.l.b16 %v82
    %v115 = vunpack.c.l.b16 %v83
    %v116 = vunpack.c.l.b16 %v84
    %v117 = vunpack.c.l.b16 %v85
    %v118 = vunpack.c.l.b16 %v86
    %v119 = vunpack.c.l.b16 %v87
    %v120 = vunpack.c.l.b16 %v88
    %v121 = vunpack.c.l.b16 %v89
    %v122 = vunpack.c.l.b16 %v90
    %v123 = vunpack.c.l.b16 %v91
    %v124 = vpack.c.b16 %v109, %v108
    %v125 = vpack.c.b16 %v111, %v110
    %v126 = vpack.c.b16 %v113, %v112
    %v127 = vpack.c.b16 %v115, %v114
    %v128 = vpack.c.b16 %v117, %v116
    %v129 = vpack.c.b16 %v119, %v118
    %v130 = vpack.c.b16 %v121, %v120
    %v131 = vpack.c.b16 %v123, %v122
    %140 = vmatprep.subr.bf16.mxu0 0
    %141 = vmatpush1.bf16.msra.mxu0 %v124
    %142 = vmatprep.subr.bf16.mxu0 0
    %143 = vmatpush1.bf16.msra.mxu0 %v125
    %144 = vmatprep.subr.bf16.mxu0 0
    %145 = vmatpush1.bf16.msra.mxu0 %v126
    %146 = vmatprep.subr.bf16.mxu0 0
    %147 = vmatpush1.bf16.msra.mxu0 %v127
    %148 = vmatprep.subr.bf16.mxu0 0
    %149 = vmatpush1.bf16.msra.mxu0 %v128
    %150 = vmatprep.subr.bf16.mxu0 0
    %151 = vmatpush1.bf16.msra.mxu0 %v129
    %152 = vmatprep.subr.bf16.mxu0 0
    %153 = vmatpush1.bf16.msra.mxu0 %v130
    %154 = vmatprep.subr.bf16.mxu0 0
    %155 = vmatpush1.bf16.msra.mxu0 %v131
    %156 = vmatprep.subr.bf16.mxu0 0
    %157 = vmatpush1.bf16.msra.mxu0 0
    %158 = vmatprep.subr.bf16.mxu0 0
    %159 = vmatpush1.bf16.msra.mxu0 0
    %160 = vmatprep.subr.bf16.mxu0 0
    %161 = vmatpush1.bf16.msra.mxu0 0
    %162 = vmatprep.subr.bf16.mxu0 0
    %163 = vmatpush1.bf16.msra.mxu0 0
    %164 = vmatprep.subr.bf16.mxu0 0
    %165 = vmatpush1.bf16.msra.mxu0 0
    %166 = vmatprep.subr.bf16.mxu0 0
    %167 = vmatpush1.bf16.msra.mxu0 0
    %168 = vmatprep.subr.bf16.mxu0 0
    %169 = vmatpush1.bf16.msra.mxu0 0
    %170 = vmatprep.subr.bf16.mxu0 0
    %171 = vmatpush1.bf16.msra.mxu0 0
    %172 = vmatprep.mubr.bf16.mxu0 0
    %173 = vmatmul.mubr.bf16.gmra.mrb[0].mxu0 %v75
    %v174 = vpop.f32.mrb[0].mxu0
    %v175 = vadd.f32 0.0, %v174
    %v176 = vpop.f32.mrb[0].mxu0
    %v177 = vpop.f32.mrb[0].mxu0
    %v178 = vpop.f32.mrb[0].mxu0
    %179 = vdwg.mxu0
    %v180 = vpack.c.bf16 %v73, %v73
    %v181 = vld [vmem:[#allocation8] sm:$0xf]
    %v182 = vld [vmem:[#allocation8 + $0x4] sm:$0xf]
    %v183 = vld [vmem:[#allocation8 + $0x8] sm:$0xf]
    %v184 = vld [vmem:[#allocation8 + $0xc] sm:$0xf]
    %v185 = vld [vmem:[#allocation8 + $0x10] sm:$0xf]
    %v186 = vld [vmem:[#allocation8 + $0x14] sm:$0xf]
    %v187 = vld [vmem:[#allocation8 + $0x18] sm:$0xf]
    %v188 = vld [vmem:[#allocation8 + $0x1c] sm:$0xf]
    %v189 = vld [vmem:[#allocation8 + $0x20] sm:$0xf]
    %v190 = vld [vmem:[#allocation8 + $0x24] sm:$0xf]
    %v191 = vld [vmem:[#allocation8 + $0x28] sm:$0xf]
    %v192 = vld [vmem:[#allocation8 + $0x2c] sm:$0xf]
    %v193 = vld [vmem:[#allocation8 + $0x30] sm:$0xf]
    %v194 = vld [vmem:[#allocation8 + $0x34] sm:$0xf]
    %v195 = vld [vmem:[#allocation8 + $0x38] sm:$0xf]
    %v196 = vld [vmem:[#allocation8 + $0x3c] sm:$0xf]
    %v197 = vld [vmem:[%s4] sm:$0x1]
    %v199 = vlaneseq
    %v200 = vshrl.u32 %v199, 7
    %v201 = vsub.s32 0, %v200
    %v202 = vrot.slane %v197, %v201
    %v220 = vunpack.c.l.b16 %v181
    %v221 = vunpack.c.l.b16 %v182
    %v222 = vunpack.c.l.b16 %v183
    %v223 = vunpack.c.l.b16 %v184
    %v224 = vunpack.c.l.b16 %v185
    %v225 = vunpack.c.l.b16 %v186
    %v226 = vunpack.c.l.b16 %v187
    %v227 = vunpack.c.l.b16 %v188
    %v228 = vunpack.c.l.b16 %v189
    %v229 = vunpack.c.l.b16 %v190
    %v230 = vunpack.c.l.b16 %v191
    %v231 = vunpack.c.l.b16 %v192
    %v232 = vunpack.c.l.b16 %v193
    %v233 = vunpack.c.l.b16 %v194
    %v234 = vunpack.c.l.b16 %v195
    %v235 = vunpack.c.l.b16 %v196
    %v236 = vpack.c.b16 %v221, %v220
    %v237 = vpack.c.b16 %v223, %v222
    %v238 = vpack.c.b16 %v225, %v224
    %v239 = vpack.c.b16 %v227, %v226
    %v240 = vpack.c.b16 %v229, %v228
    %v241 = vpack.c.b16 %v231, %v230
    %v242 = vpack.c.b16 %v233, %v232
    %v243 = vpack.c.b16 %v235, %v234
    %252 = vmatprep.subr.bf16.mxu0 0
    %253 = vmatpush1.bf16.msra.mxu0 %v236
    %254 = vmatprep.subr.bf16.mxu0 0
    %255 = vmatpush1.bf16.msra.mxu0 %v237
    %256 = vmatprep.subr.bf16.mxu0 0
    %257 = vmatpush1.bf16.msra.mxu0 %v238
    %258 = vmatprep.subr.bf16.mxu0 0
    %259 = vmatpush1.bf16.msra.mxu0 %v239
    %260 = vmatprep.subr.bf16.mxu0 0
    %261 = vmatpush1.bf16.msra.mxu0 %v240
    %262 = vmatprep.subr.bf16.mxu0 0
    %263 = vmatpush1.bf16.msra.mxu0 %v241
    %264 = vmatprep.subr.bf16.mxu0 0
    %265 = vmatpush1.bf16.msra.mxu0 %v242
    %266 = vmatprep.subr.bf16.mxu0 0
    %267 = vmatpush1.bf16.msra.mxu0 %v243
    %268 = vmatprep.subr.bf16.mxu0 0
    %269 = vmatpush1.bf16.msra.mxu0 0
    %270 = vmatprep.subr.bf16.mxu0 0
    %271 = vmatpush1.bf16.msra.mxu0 0
    %272 = vmatprep.subr.bf16.mxu0 0
    %273 = vmatpush1.bf16.msra.mxu0 0
    %274 = vmatprep.subr.bf16.mxu0 0
    %275 = vmatpush1.bf16.msra.mxu0 0
    %276 = vmatprep.subr.bf16.mxu0 0
    %277 = vmatpush1.bf16.msra.mxu0 0
    %278 = vmatprep.subr.bf16.mxu0 0
    %279 = vmatpush1.bf16.msra.mxu0 0
    %280 = vmatprep.subr.bf16.mxu0 0
    %281 = vmatpush1.bf16.msra.mxu0 0
    %282 = vmatprep.subr.bf16.mxu0 0
    %283 = vmatpush1.bf16.msra.mxu0 0
    %284 = vmatprep.mubr.bf16.mxu0 0
    %285 = vmatmul.mubr.bf16.gmra.mrb[0].mxu0 %v180
    %v286 = vpop.f32.mrb[0].mxu0
    %v287 = vadd.f32 %v202, %v286
    %v288 = vpop.f32.mrb[0].mxu0
    %v289 = vpop.f32.mrb[0].mxu0
    %v290 = vpop.f32.mrb[0].mxu0
    %291 = vdwg.mxu0
    %v292 = vxor.u32 %v287, 2147483648
    %v293 = vmul.f32 %v292, 1.442695
    %v294 = vpow.pop %v293
    %v295 = vadd.f32 %v294, 1.0
    %v296 = vrcp.pop %v295
    %v297 = vmul.f32 1.0, %v296
    %v298 = vsub.f32 %v175, %v73
    %v299 = vmul.f32 %v297, %v298
    %v300 = vadd.f32 %v73, %v299
    %301 = vst [vmem:[#allocation10] sm:$0xff] %v300
    // Predicated region
    $region38: #{tpu_custom_call.1} parent=1 // pred_check
      _
    $region39: #{tpu_custom_call.1} parent=1 // pred_check_branch
      %303 = sbr.rel (0) target = $region41
    $region40: #{tpu_custom_call.1} parent=1 // pred_region
      %s305 = ssub.s32 128, 128
      %306 = vsyncadd [#allocation4], %s305
      %s308 = sshll.u32 [#allocation10], 4
      %s309 = int_to_ptr.vmem [resolvable:$true] %s308
      %311 = dma.vmem_to_hbm [thread:$0]  %s309, 128, %s5, [#allocation4]
    $region41: #{tpu_custom_call.1} parent=1 // pred_fallthru
      _
    // Predicated region
    $region42: #{tpu_custom_call.1} parent=1 // pred_check
      _
    $region43: #{tpu_custom_call.1} parent=1 // pred_check_branch
      %313 = sbr.rel (0) target = $region45
    $region44: #{tpu_custom_call.1} parent=1 // pred_region
      %314 = dma.done [#allocation4], 128
    $region45: #{tpu_custom_call.1} parent=1 // pred_fallthru
      _
    %315 = vsyncpa [#allocation3], 1
    %316 = vsyncpa [#allocation6], 1
    %317 = vsyncpa [#allocation9], 1
    %318 = vsyncpa [#allocation4], 1

</llo_original>
